<compile_context>
chip_gen: v7x
topology: tpu7x:2x2x1
jax: 0.10.0
libtpu: 0.0.40
codegen_flags: <defaults>
</compile_context>

<pallas_src>
import jax
import jax.numpy as jnp
from jax.experimental import pallas as pl
from jax.experimental.pallas import tpu as pltpu


def _round_up(x, m):
    return ((x + m - 1) // m) * m


# ---------------------------------------------------------------------------
# Pallas kernel: one batch tile (TB boards, each with M candidate moves) per step.
# ---------------------------------------------------------------------------
def gradnet_kernel(board_ref, hold_ref, moves_ref, a_ref, bh_ref, cblk_ref, d_ref,
                   out_ref):
    def _as_mxu(x):
        # Integer planes (e.g. int8 one-hot shogi features): v7x's MXU has no int path,
        # so do a cheap VPU cast to bf16; float inputs (f32/bf16) pass straight through.
        return x.astype(jnp.bfloat16) if jnp.issubdtype(x.dtype, jnp.integer) else x

    board = _as_mxu(board_ref[...])
    hold = _as_mxu(hold_ref[...])
    moves = _as_mxu(moves_ref[...])

    # Per-board affine part: (TB, 1)
    base = (jnp.dot(board, a_ref[...], preferred_element_type=jnp.float32)
            + jnp.dot(hold, bh_ref[...], preferred_element_type=jnp.float32)
            + d_ref[0, 0])
    # Per-move part computed directly in (TB, M) layout: moves block is (TB, M*96)
    # (lane-dense, 768 = 6*128) and cblk = kron(I_M, C) is block-diagonal, so
    # mv[t, m] = moves[t, m, :] @ C with zero in-kernel reshapes.
    mv = jnp.dot(moves, cblk_ref[...], preferred_element_type=jnp.float32)
    out_ref[...] = base + mv


# ---------------------------------------------------------------------------
# One-time param folding (exact: the module has no activation functions).
# Also builds the block-diagonal move weight kron(I_M, C) once (hoisted out of the
# per-call wrapper per the perf review).
# ---------------------------------------------------------------------------
def fold_params(params, num_moves):
    W1, b1 = params["board_catch_w"], params["board_catch_b"]   # (243,810), (243,)
    W2, b2 = params["board_mixed_w"], params["board_mixed_b"]   # (257,257), (257,)
    W3, b3 = params["combine_w"], params["combine_b"]           # (100,353), (100,)
    W4, b4 = params["mixed1_w"], params["mixed1_b"]             # (100,100), (100,)
    W5, b5 = params["mixed2_w"], params["mixed2_b"]             # (20,100),  (20,)
    W6, b6 = params["digest_w"], params["digest_b"]             # (1,20),    (1,)

    n_catch = W1.shape[0]                         # 243
    n_mixed = W2.shape[0]                         # 257
    W2a, W2b = W2[:, :n_catch], W2[:, n_catch:]   # board-part / hold-part of cat
    W3a, W3b = W3[:, :n_mixed], W3[:, n_mixed:]   # fullboard-part / moves-part of cat

    t56 = W5.T @ W6.T            # (100, 1)  mixed2 -> digest
    t456 = W4.T @ t56            # (100, 1)  mixed1 -> digest
    m3 = W3a.T @ t456            # (257, 1)  fullboard path through combine
    c_vec = W3b.T @ t456         # (96, 1)   moves path through combine
    p = W2a.T @ m3               # (243, 1)
    a_vec = W1.T @ p             # (810, 1)  board coefficient
    bh_vec = W2b.T @ m3          # (14, 1)   hold coefficient
    # Folded bias chain (b1..b6 propagated through the remaining layers).
    d = b1 @ p + b2 @ m3 + b3 @ t456 + b4 @ t56 + b5 @ W6.T + b6   # (1,)

    c_vec = c_vec.astype(jnp.float32)
    # Block-diagonal folded move weight: (M*96, M); column m holds C for move m.
    cblk = jnp.kron(jnp.eye(num_moves, dtype=jnp.float32), c_vec)

    return {
        "a": a_vec.astype(jnp.float32),
        "bh": bh_vec.astype(jnp.float32),
        "c": c_vec,
        "cblk": cblk,
        "d": d.reshape(1, 1).astype(jnp.float32),
    }


# ---------------------------------------------------------------------------
# Wrapper: batch tiling (no padding copies), lane-dense moves layout + pallas_call.
# ---------------------------------------------------------------------------
def gradient_network_forward(board, hold, moves, folded, *, block_b=1024):
    B, _, f_board = board.shape
    _, _, f_hold = hold.shape
    _, M, f_move = moves.shape

    a_vec, bh_vec, d = folded["a"], folded["bh"], folded["d"]
    cblk = folded.get("cblk")
    if cblk is None or cblk.shape != (M * f_move, M):
        # Fallback if fold_params was built for a different move count.
        cblk = jnp.kron(jnp.eye(M, dtype=jnp.float32), folded["c"])

    # ---- batch-tile selection -------------------------------------------------
    # Scoped-VMEM budget for the double-buffered tiles (safe on v5e/v6e/v7x; v7x has
    # 64 MiB physical VMEM so 32 MiB scoped is fine, v5e/v6e have 128 MiB physical).
    lane = lambda n: _round_up(n, 128)
    in_item = max(board.dtype.itemsize, hold.dtype.itemsize, moves.dtype.itemsize)
    row_bytes = 2 * (in_item * (lane(f_board) + lane(f_hold) + lane(M * f_move))
                     + 4 * lane(M))                              # double-buffered
    weight_bytes = 2 * 4 * (_round_up(f_board, 8) * 128
                            + _round_up(f_hold, 8) * 128
                            + _round_up(M * f_move, 8) * lane(M))
    vmem_budget = 28 << 20
    max_tb = max(8, ((vmem_budget - weight_bytes) // row_bytes) // 8 * 8)

    TB = min(block_b, max_tb, _round_up(B, 8))
    if TB >= B:
        if B >= 16:
            # Guarantee >= 2 grid steps so the "parallel" batch axis can shard across
            # v7x's two TensorCores (negligible cost on single-TC v5e/v6e).
            TB = _round_up(-(-B // 2), 8)
        else:
            TB = B                      # single full-extent block for tiny batches
    else:
        TB = max(8, (TB // 8) * 8)      # tiled blocks must be sublane-aligned
    G = pl.cdiv(B, TB)                  # partial last block handled by Pallas masking

    # Free metadata reshapes (no copies): lane-dense (TB, M*96) move rows.
    board2 = board.reshape(B, f_board)
    hold2 = hold.reshape(B, f_hold)
    moves2 = moves.reshape(B, M * f_move)

    grid_spec = pltpu.PrefetchScalarGridSpec(
        num_scalar_prefetch=0,
        grid=(G,),
        in_specs=[
            pl.BlockSpec((TB, f_board), lambda i: (i, 0)),       # board tile
            pl.BlockSpec((TB, f_hold), lambda i: (i, 0)),        # hold tile
            pl.BlockSpec((TB, M * f_move), lambda i: (i, 0)),    # moves tile (lane-dense)
            pl.BlockSpec((f_board, 1), lambda i: (0, 0)),        # A   (replicated)
            pl.BlockSpec((f_hold, 1), lambda i: (0, 0)),         # Bh  (replicated)
            pl.BlockSpec((M * f_move, M), lambda i: (0, 0)),     # kron(I_M, C)
            pl.BlockSpec(memory_space=pltpu.MemorySpace.SMEM),   # folded bias d (scalar)
        ],
        out_specs=pl.BlockSpec((TB, M), lambda i: (i, 0)),
    )

    bytes_accessed = int(board2.size * board2.dtype.itemsize
                         + hold2.size * hold2.dtype.itemsize
                         + moves2.size * moves2.dtype.itemsize
                         + B * M * 4
                         + (a_vec.size + bh_vec.size + cblk.size + 1) * 4)
    flops = int(2 * B * (f_board + f_hold + M * f_move))

    out = pl.pallas_call(
        gradnet_kernel,
        out_shape=jax.ShapeDtypeStruct((B, M), jnp.float32),
        grid_spec=grid_spec,
        compiler_params=pltpu.CompilerParams(
            dimension_semantics=("parallel",),
            vmem_limit_bytes=32 * 1024 * 1024,
        ),
        cost_estimate=pl.CostEstimate(
            flops=flops, transcendentals=0, bytes_accessed=bytes_accessed),
    )(board2, hold2, moves2, a_vec, bh_vec, cblk, d)

    return out.reshape(B, M, 1)


# ---------------------------------------------------------------------------
# Pure-JAX reference (mirrors the PyTorch forward literally, layer by layer)
# ---------------------------------------------------------------------------
def reference_forward(board, hold, moves, params):
    def lin(x, w, b):
        return x @ w.T + b

    b_out = lin(board, params["board_catch_w"], params["board_catch_b"])
    fullboard = jnp.concatenate([b_out, hold], axis=2)
    fullboard = lin(fullboard, params["board_mixed_w"], params["board_mixed_b"])
    rep = jnp.repeat(fullboard, moves.shape[1], axis=1)
    fullstate = jnp.concatenate([rep, moves], axis=2)
    fullstate = lin(fullstate, params["combine_w"], params["combine_b"])
    fullstate = lin(fullstate, params["mixed1_w"], params["mixed1_b"])
    fullstate = lin(fullstate, params["mixed2_w"], params["mixed2_b"])
    return lin(fullstate, params["digest_w"], params["digest_b"])


# ---------------------------------------------------------------------------
# Deterministic parameter init (PyTorch-style uniform(-1/sqrt(fan_in), +...))
# ---------------------------------------------------------------------------
def init_params(key):
    layer_dims = {
        "board_catch": (243, 810),
        "board_mixed": (257, 257),
        "combine": (100, 353),
        "mixed1": (100, 100),
        "mixed2": (20, 100),
        "digest": (1, 20),
    }
    params = {}
    for name, (out_f, in_f) in layer_dims.items():
        key, kw, kb = jax.random.split(key, 3)
        bound = 1.0 / (in_f ** 0.5)
        params[f"{name}_w"] = jax.random.uniform(
            kw, (out_f, in_f), jnp.float32, -bound, bound)
        params[f"{name}_b"] = jax.random.uniform(
            kb, (out_f,), jnp.float32, -bound, bound)
    return params


if __name__ == "__main__":
    key = jax.random.PRNGKey(0)
    kp, kb1, kh1, km1, kb2, kh2, km2, kb3, kh3, km3 = jax.random.split(key, 10)

    M = 8
    params = init_params(kp)
    folded = fold_params(params, num_moves=M)   # one-time exact affine fold (+ cblk)

    # Check 1: tiny batch -> single full-extent block, G=1.
    B = 2
    board = jax.random.normal(kb1, (B, 1, 810), jnp.float32)
    hold = jax.random.normal(kh1, (B, 1, 14), jnp.float32)
    moves = jax.random.normal(km1, (B, M, 96), jnp.float32)

    scores = gradient_network_forward(board, hold, moves, folded)
    scores = jax.block_until_ready(scores)
    ref = reference_forward(board, hold, moves, params)
    assert scores.shape == (B, M, 1), scores.shape
    assert jnp.allclose(scores, ref, atol=1e-4, rtol=1e-4), (
        float(jnp.max(jnp.abs(scores - ref))))

    # Check 2: multi-step grid + partial edge block (no wrapper-side padding).
    B2 = 45
    board2 = jax.random.normal(kb2, (B2, 1, 810), jnp.float32)
    hold2 = jax.random.normal(kh2, (B2, 1, 14), jnp.float32)
    moves2 = jax.random.normal(km2, (B2, M, 96), jnp.float32)

    scores2 = gradient_network_forward(board2, hold2, moves2, folded, block_b=16)
    scores2 = jax.block_until_ready(scores2)
    ref2 = reference_forward(board2, hold2, moves2, params)
    assert scores2.shape == (B2, M, 1), scores2.shape
    assert jnp.allclose(scores2, ref2, atol=1e-4, rtol=1e-4), (
        float(jnp.max(jnp.abs(scores2 - ref2))))

    # Check 3: default block_b path -> tile split into 2 grid steps (megacore path)
    # with a partial last block.
    B3 = 300
    board3 = jax.random.normal(kb3, (B3, 1, 810), jnp.float32)
    hold3 = jax.random.normal(kh3, (B3, 1, 14), jnp.float32)
    moves3 = jax.random.normal(km3, (B3, M, 96), jnp.float32)

    scores3 = gradient_network_forward(board3, hold3, moves3, folded)
    scores3 = jax.block_until_ready(scores3)
    ref3 = reference_forward(board3, hold3, moves3, params)
    assert scores3.shape == (B3, M, 1), scores3.shape
    assert jnp.allclose(scores3, ref3, atol=2e-4, rtol=2e-4), (
        float(jnp.max(jnp.abs(scores3 - ref3))))

    print("KERNEL_OK")
</pallas_src>

<mosaic_0001>
module attributes {stable_mosaic.version = 11 : i64} {
  func.func @gradnet_kernel(%arg0: i32, %arg1: memref<2x810xf32, #tpu.memory_space<vmem>>, %arg2: memref<2x14xf32, #tpu.memory_space<vmem>>, %arg3: memref<2x768xf32, #tpu.memory_space<vmem>>, %arg4: memref<810x1xf32, #tpu.memory_space<vmem>>, %arg5: memref<14x1xf32, #tpu.memory_space<vmem>>, %arg6: memref<768x8xf32, #tpu.memory_space<vmem>>, %arg7: memref<1x1xf32, #tpu.memory_space<smem>>, %arg8: memref<2x8xf32, #tpu.memory_space<vmem>>) attributes {dimension_semantics = [#tpu.dimension_semantics<parallel>], iteration_bounds = array<i64: 1>, scalar_prefetch = 0 : i64, scratch_operands = 0 : i64, tpu.core_type = #tpu.core_type<tc>, window_params = [{transform_indices = @transform_0, window_bounds = array<i64: 2, 810>}, {transform_indices = @transform_1, window_bounds = array<i64: 2, 14>}, {transform_indices = @transform_2, window_bounds = array<i64: 2, 768>}, {pipeline_mode = #tpu.pipeline_mode<synchronous>, transform_indices = @transform_3, window_bounds = array<i64: 810, 1>}, {pipeline_mode = #tpu.pipeline_mode<synchronous>, transform_indices = @transform_4, window_bounds = array<i64: 14, 1>}, {pipeline_mode = #tpu.pipeline_mode<synchronous>, transform_indices = @transform_5, window_bounds = array<i64: 768, 8>}, {transform_indices = @transform_6, window_bounds = array<i64: 1, 1>}, {transform_indices = @transform_7, window_bounds = array<i64: 2, 8>}]} {
    %c0 = arith.constant 0 : index
    %c0_0 = arith.constant 0 : index
    %0 = vector.load %arg1[%c0, %c0_0] : memref<2x810xf32, #tpu.memory_space<vmem>>, vector<2x810xf32>
    %c0_1 = arith.constant 0 : index
    %c0_2 = arith.constant 0 : index
    %1 = vector.load %arg2[%c0_1, %c0_2] : memref<2x14xf32, #tpu.memory_space<vmem>>, vector<2x14xf32>
    %c0_3 = arith.constant 0 : index
    %c0_4 = arith.constant 0 : index
    %2 = vector.load %arg3[%c0_3, %c0_4] : memref<2x768xf32, #tpu.memory_space<vmem>>, vector<2x768xf32>
    %c0_5 = arith.constant 0 : index
    %c0_6 = arith.constant 0 : index
    %3 = vector.load %arg4[%c0_5, %c0_6] : memref<810x1xf32, #tpu.memory_space<vmem>>, vector<810x1xf32>
    %cst = arith.constant dense<0.000000e+00> : vector<2x1xf32>
    %4 = tpu.matmul %0, %3, %cst {dimension_numbers = #tpu.dot_dimension_numbers<[1], [0], [0], [1], [0, 0, 1, 1], [], []>} : vector<2x810xf32>, vector<810x1xf32>, vector<2x1xf32> -> vector<2x1xf32>
    %c0_7 = arith.constant 0 : index
    %c0_8 = arith.constant 0 : index
    %5 = vector.load %arg5[%c0_7, %c0_8] : memref<14x1xf32, #tpu.memory_space<vmem>>, vector<14x1xf32>
    %cst_9 = arith.constant dense<0.000000e+00> : vector<2x1xf32>
    %6 = tpu.matmul %1, %5, %cst_9 {dimension_numbers = #tpu.dot_dimension_numbers<[1], [0], [0], [1], [0, 0, 1, 1], [], []>} : vector<2x14xf32>, vector<14x1xf32>, vector<2x1xf32> -> vector<2x1xf32>
    %7 = arith.addf %4, %6 : vector<2x1xf32>
    %c0_10 = arith.constant 0 : index
    %c0_11 = arith.constant 0 : index
    %8 = memref.load %arg7[%c0_10, %c0_11] : memref<1x1xf32, #tpu.memory_space<smem>>
    %9 = vector.broadcast %8 : f32 to vector<2x1xf32>
    %10 = arith.addf %7, %9 : vector<2x1xf32>
    %c0_12 = arith.constant 0 : index
    %c0_13 = arith.constant 0 : index
    %11 = vector.load %arg6[%c0_12, %c0_13] : memref<768x8xf32, #tpu.memory_space<vmem>>, vector<768x8xf32>
    %cst_14 = arith.constant dense<0.000000e+00> : vector<2x8xf32>
    %12 = tpu.matmul %2, %11, %cst_14 {dimension_numbers = #tpu.dot_dimension_numbers<[1], [0], [0], [1], [0, 0, 1, 1], [], []>} : vector<2x768xf32>, vector<768x8xf32>, vector<2x8xf32> -> vector<2x8xf32>
    %13 = vector.broadcast %10 : vector<2x1xf32> to vector<2x8xf32>
    %14 = arith.addf %13, %12 : vector<2x8xf32>
    %c0_15 = arith.constant 0 : index
    %c0_16 = arith.constant 0 : index
    %15 = vector.load %arg8[%c0_15, %c0_16] : memref<2x8xf32, #tpu.memory_space<vmem>>, vector<2x8xf32>
    tpu.vector_store %arg8[%c0_15, %c0_16], %14 {strides = array<i32>} : memref<2x8xf32, #tpu.memory_space<vmem>>, vector<2x8xf32>,
    return
  }
  func.func @transform_0(%arg0: i32) -> (i32, i32) {
    %c0_i32 = arith.constant 0 : i32
    %c0_i32_0 = arith.constant 0 : i32
    return %arg0, %c0_i32 : i32, i32
  }
  func.func @transform_1(%arg0: i32) -> (i32, i32) {
    %c0_i32 = arith.constant 0 : i32
    %c0_i32_0 = arith.constant 0 : i32
    return %arg0, %c0_i32 : i32, i32
  }
  func.func @transform_2(%arg0: i32) -> (i32, i32) {
    %c0_i32 = arith.constant 0 : i32
    %c0_i32_0 = arith.constant 0 : i32
    return %arg0, %c0_i32 : i32, i32
  }
  func.func @transform_3(%arg0: i32) -> (i32, i32) {
    %c0_i32 = arith.constant 0 : i32
    %c0_i32_0 = arith.constant 0 : i32
    %c0_i32_1 = arith.constant 0 : i32
    return %c0_i32, %c0_i32_0 : i32, i32
  }
  func.func @transform_4(%arg0: i32) -> (i32, i32) {
    %c0_i32 = arith.constant 0 : i32
    %c0_i32_0 = arith.constant 0 : i32
    %c0_i32_1 = arith.constant 0 : i32
    return %c0_i32, %c0_i32_0 : i32, i32
  }
  func.func @transform_5(%arg0: i32) -> (i32, i32) {
    %c0_i32 = arith.constant 0 : i32
    %c0_i32_0 = arith.constant 0 : i32
    %c0_i32_1 = arith.constant 0 : i32
    return %c0_i32, %c0_i32_0 : i32, i32
  }
  func.func @transform_6(%arg0: i32) -> (i32, i32) {
    %c0_i32 = arith.constant 0 : i32
    %c0_i32_0 = arith.constant 0 : i32
    %c0_i32_1 = arith.constant 0 : i32
    return %c0_i32, %c0_i32_0 : i32, i32
  }
  func.func @transform_7(%arg0: i32) -> (i32, i32) {
    %c0_i32 = arith.constant 0 : i32
    %c0_i32_0 = arith.constant 0 : i32
    return %arg0, %c0_i32 : i32, i32
  }
}

</mosaic_0001>

<llo_original>
// kernel: tpu_custom_call.1
$region0: #{tpu_custom_call.1}
  #allocation0 [shape = 'u32[]', space=smem, size = 0x4, offset = 0x4, fixed_abs, tag = 'smem constant byte address 0x4 - core index']
  #allocation1 [shape = 'u32[144,128]{1,0:T(1,128)}', space=vmem, size = 0x12000, scoped, tag = 'internal scratch']
  #allocation2 [shape = 'f32[1,1]{1,0:T(1,128)S(6)}', space=smem, size = 0x200, scoped, tag = 'scoped memory for tpu_custom_call.1']
  %s0 = inlined_call_operand.vmem [shape: f32[2,810], index: 0, kind: input, shape index: {}]
  %s1 = inlined_call_operand.vmem [shape: f32[2,14], index: 1, kind: input, shape index: {}]
  %s2 = inlined_call_operand.vmem [shape: f32[2,768], index: 2, kind: input, shape index: {}]
  %s3 = inlined_call_operand.vmem [shape: f32[810,1], index: 3, kind: input, shape index: {}]
  %s4 = inlined_call_operand.vmem [shape: f32[14,1], index: 4, kind: input, shape index: {}]
  %s5 = inlined_call_operand.vmem [shape: f32[768,8], index: 5, kind: input, shape index: {}]
  %s6 = inlined_call_operand.<no memory space> [shape: f32[1,1], index: 6, kind: input, shape index: {}]
  %s7 = inlined_call_operand.hbm [shape: f32[2,8], index: 7, kind: output, shape index: {}]
  %s8 = sld [smem:[#allocation0]]
  $region38: #{tpu_custom_call.1} parent=0
    _
  %s10 = ssub.s32 1, %s8
  %s11 = scalar_select 0, %s10, %s8
  %12 = sst [smem:[#allocation2]] %s6
  $region1: #{tpu_custom_call.1} parent=0
    #allocation3 [shape = 'u8[1024]{0}', space=vmem, size = 0x400, scoped, tag = 'output window, operand 0, single buffered']
    #allocation4 [shape = 's32[1]{0}', space=sflag, size = 0x4, scoped, tag = 'scoped memory for tpu_custom_call.1']
    %13 = vsyncpa [#allocation4], 0
    // Predicated region
    $region2: #{tpu_custom_call.1} parent=1 // pred_check
      _
    $region3: #{tpu_custom_call.1} parent=1 // pred_check_branch
      %15 = sbr.rel (0) target = $region5
    $region4: #{tpu_custom_call.1} parent=1 // pred_region
      _
    $region5: #{tpu_custom_call.1} parent=1 // pred_fallthru
      _
    // Predicated region
    $region6: #{tpu_custom_call.1} parent=1 // pred_check
      _
    $region7: #{tpu_custom_call.1} parent=1 // pred_check_branch
      %17 = sbr.rel (0) target = $region9
    $region8: #{tpu_custom_call.1} parent=1 // pred_region
      _
    $region9: #{tpu_custom_call.1} parent=1 // pred_fallthru
      _
    // Predicated region
    $region10: #{tpu_custom_call.1} parent=1 // pred_check
      _
    $region11: #{tpu_custom_call.1} parent=1 // pred_check_branch
      %19 = sbr.rel (0) target = $region13
    $region12: #{tpu_custom_call.1} parent=1 // pred_region
      _
    $region13: #{tpu_custom_call.1} parent=1 // pred_fallthru
      _
    // Predicated region
    $region14: #{tpu_custom_call.1} parent=1 // pred_check
      _
    $region15: #{tpu_custom_call.1} parent=1 // pred_check_branch
      %21 = sbr.rel (0) target = $region17
    $region16: #{tpu_custom_call.1} parent=1 // pred_region
      _
    $region17: #{tpu_custom_call.1} parent=1 // pred_fallthru
      _
    // Predicated region
    $region18: #{tpu_custom_call.1} parent=1 // pred_check
      _
    $region19: #{tpu_custom_call.1} parent=1 // pred_check_branch
      %23 = sbr.rel (0) target = $region21
    $region20: #{tpu_custom_call.1} parent=1 // pred_region
      _
    $region21: #{tpu_custom_call.1} parent=1 // pred_fallthru
      _
    // Predicated region
    $region22: #{tpu_custom_call.1} parent=1 // pred_check
      _
    $region23: #{tpu_custom_call.1} parent=1 // pred_check_branch
      %25 = sbr.rel (0) target = $region25
    $region24: #{tpu_custom_call.1} parent=1 // pred_region
      _
    $region25: #{tpu_custom_call.1} parent=1 // pred_fallthru
      _
    // Predicated region
    $region26: #{tpu_custom_call.1} parent=1 // pred_check
      _
    $region27: #{tpu_custom_call.1} parent=1 // pred_check_branch
      %27 = sbr.rel (0) target = $region29
    $region28: #{tpu_custom_call.1} parent=1 // pred_region
      _
    $region29: #{tpu_custom_call.1} parent=1 // pred_fallthru
      _
    %v28 = vld [vmem:[%s0] sm:$0xff]
    %v29 = vld [vmem:[%s0 + $0x8] sm:$0x3f]
    %v30 = vld [vmem:[%s1] sm:$0x3]
    %v31 = vld [vmem:[%s2] sm:$0xff]
    %v32 = vld [vmem:[%s2 + $0x8] sm:$0xf]
    %v33 = vld [vmem:[%s3] sm:$0xff]
    %v34 = vld [vmem:[%s3 + $0x8] sm:$0xff]
    %v35 = vld [vmem:[%s3 + $0x10] sm:$0xff]
    %v36 = vld [vmem:[%s3 + $0x18] sm:$0xff]
    %v37 = vld [vmem:[%s3 + $0x20] sm:$0xff]
    %v38 = vld [vmem:[%s3 + $0x28] sm:$0xff]
    %v39 = vld [vmem:[%s3 + $0x30] sm:$0xff]
    %v40 = vld [vmem:[%s3 + $0x38] sm:$0xff]
    %v41 = vld [vmem:[%s3 + $0x40] sm:$0xff]
    %v42 = vld [vmem:[%s3 + $0x48] sm:$0xff]
    %v43 = vld [vmem:[%s3 + $0x50] sm:$0xff]
    %v44 = vld [vmem:[%s3 + $0x58] sm:$0xff]
    %v45 = vld [vmem:[%s3 + $0x60] sm:$0xff]
    %v46 = vld [vmem:[%s3 + $0x68] sm:$0xff]
    %v47 = vld [vmem:[%s3 + $0x70] sm:$0xff]
    %v48 = vld [vmem:[%s3 + $0x78] sm:$0xff]
    %v49 = vld [vmem:[%s3 + $0x80] sm:$0xff]
    %v50 = vld [vmem:[%s3 + $0x88] sm:$0xff]
    %v51 = vld [vmem:[%s3 + $0x90] sm:$0xff]
    %v52 = vld [vmem:[%s3 + $0x98] sm:$0xff]
    %v53 = vld [vmem:[%s3 + $0xa0] sm:$0xff]
    %v54 = vld [vmem:[%s3 + $0xa8] sm:$0xff]
    %v55 = vld [vmem:[%s3 + $0xb0] sm:$0xff]
    %v56 = vld [vmem:[%s3 + $0xb8] sm:$0xff]
    %v57 = vld [vmem:[%s3 + $0xc0] sm:$0xff]
    %v58 = vld [vmem:[%s3 + $0xc8] sm:$0xff]
    %v59 = vld [vmem:[%s3 + $0xd0] sm:$0xff]
    %v60 = vld [vmem:[%s3 + $0xd8] sm:$0xff]
    %v61 = vld [vmem:[%s3 + $0xe0] sm:$0xff]
    %v62 = vld [vmem:[%s3 + $0xe8] sm:$0xff]
    %v63 = vld [vmem:[%s3 + $0xf0] sm:$0xff]
    %v64 = vld [vmem:[%s3 + $0xf8] sm:$0xff]
    %v65 = vld [vmem:[%s3 + $0x100] sm:$0xff]
    %v66 = vld [vmem:[%s3 + $0x108] sm:$0xff]
    %v67 = vld [vmem:[%s3 + $0x110] sm:$0xff]
    %v68 = vld [vmem:[%s3 + $0x118] sm:$0xff]
    %v69 = vld [vmem:[%s3 + $0x120] sm:$0xff]
    %v70 = vld [vmem:[%s3 + $0x128] sm:$0xff]
    %v71 = vld [vmem:[%s3 + $0x130] sm:$0xff]
    %v72 = vld [vmem:[%s3 + $0x138] sm:$0xff]
    %v73 = vld [vmem:[%s3 + $0x140] sm:$0xff]
    %v74 = vld [vmem:[%s3 + $0x148] sm:$0xff]
    %v75 = vld [vmem:[%s3 + $0x150] sm:$0xff]
    %v76 = vld [vmem:[%s3 + $0x158] sm:$0xff]
    %v77 = vld [vmem:[%s3 + $0x160] sm:$0xff]
    %v78 = vld [vmem:[%s3 + $0x168] sm:$0xff]
    %v79 = vld [vmem:[%s3 + $0x170] sm:$0xff]
    %v80 = vld [vmem:[%s3 + $0x178] sm:$0xff]
    %v81 = vld [vmem:[%s3 + $0x180] sm:$0xff]
    %v82 = vld [vmem:[%s3 + $0x188] sm:$0xff]
    %v83 = vld [vmem:[%s3 + $0x190] sm:$0xff]
    %v84 = vld [vmem:[%s3 + $0x198] sm:$0xff]
    %v85 = vld [vmem:[%s3 + $0x1a0] sm:$0xff]
    %v86 = vld [vmem:[%s3 + $0x1a8] sm:$0xff]
    %v87 = vld [vmem:[%s3 + $0x1b0] sm:$0xff]
    %v88 = vld [vmem:[%s3 + $0x1b8] sm:$0xff]
    %v89 = vld [vmem:[%s3 + $0x1c0] sm:$0xff]
    %v90 = vld [vmem:[%s3 + $0x1c8] sm:$0xff]
    %v91 = vld [vmem:[%s3 + $0x1d0] sm:$0xff]
    %v92 = vld [vmem:[%s3 + $0x1d8] sm:$0xff]
    %v93 = vld [vmem:[%s3 + $0x1e0] sm:$0xff]
    %v94 = vld [vmem:[%s3 + $0x1e8] sm:$0xff]
    %v95 = vld [vmem:[%s3 + $0x1f0] sm:$0xff]
    %v96 = vld [vmem:[%s3 + $0x1f8] sm:$0xff]
    %v97 = vld [vmem:[%s3 + $0x200] sm:$0xff]
    %v98 = vld [vmem:[%s3 + $0x208] sm:$0xff]
    %v99 = vld [vmem:[%s3 + $0x210] sm:$0xff]
    %v100 = vld [vmem:[%s3 + $0x218] sm:$0xff]
    %v101 = vld [vmem:[%s3 + $0x220] sm:$0xff]
    %v102 = vld [vmem:[%s3 + $0x228] sm:$0xff]
    %v103 = vld [vmem:[%s3 + $0x230] sm:$0xff]
    %v104 = vld [vmem:[%s3 + $0x238] sm:$0xff]
    %v105 = vld [vmem:[%s3 + $0x240] sm:$0xff]
    %v106 = vld [vmem:[%s3 + $0x248] sm:$0xff]
    %v107 = vld [vmem:[%s3 + $0x250] sm:$0xff]
    %v108 = vld [vmem:[%s3 + $0x258] sm:$0xff]
    %v109 = vld [vmem:[%s3 + $0x260] sm:$0xff]
    %v110 = vld [vmem:[%s3 + $0x268] sm:$0xff]
    %v111 = vld [vmem:[%s3 + $0x270] sm:$0xff]
    %v112 = vld [vmem:[%s3 + $0x278] sm:$0xff]
    %v113 = vld [vmem:[%s3 + $0x280] sm:$0xff]
    %v114 = vld [vmem:[%s3 + $0x288] sm:$0xff]
    %v115 = vld [vmem:[%s3 + $0x290] sm:$0xff]
    %v116 = vld [vmem:[%s3 + $0x298] sm:$0xff]
    %v117 = vld [vmem:[%s3 + $0x2a0] sm:$0xff]
    %v118 = vld [vmem:[%s3 + $0x2a8] sm:$0xff]
    %v119 = vld [vmem:[%s3 + $0x2b0] sm:$0xff]
    %v120 = vld [vmem:[%s3 + $0x2b8] sm:$0xff]
    %v121 = vld [vmem:[%s3 + $0x2c0] sm:$0xff]
    %v122 = vld [vmem:[%s3 + $0x2c8] sm:$0xff]
    %v123 = vld [vmem:[%s3 + $0x2d0] sm:$0xff]
    %v124 = vld [vmem:[%s3 + $0x2d8] sm:$0xff]
    %v125 = vld [vmem:[%s3 + $0x2e0] sm:$0xff]
    %v126 = vld [vmem:[%s3 + $0x2e8] sm:$0xff]
    %v127 = vld [vmem:[%s3 + $0x2f0] sm:$0xff]
    %v128 = vld [vmem:[%s3 + $0x2f8] sm:$0xff]
    %v129 = vld [vmem:[%s3 + $0x300] sm:$0xff]
    %v130 = vld [vmem:[%s3 + $0x308] sm:$0xff]
    %v131 = vld [vmem:[%s3 + $0x310] sm:$0xff]
    %v132 = vld [vmem:[%s3 + $0x318] sm:$0xff]
    %v133 = vld [vmem:[%s3 + $0x320] sm:$0xff]
    %v134 = vld [vmem:[%s3 + $0x328] sm:$0x3]
    %v135 = vld [vmem:[%s4] sm:$0xff]
    %v136 = vld [vmem:[%s4 + $0x8] sm:$0x3f]
    %vm137 = vcmask 113664
    %v139 = vsel %vm137, %v30, 0
    %vm141 = vcmask 1045504
    %v143 = vsel %vm141, %v136, 0
    %145 = vmatprep.subr.mxu0 0.0
    %146 = vmatpush1.msra.mxu0 %v135
    %147 = vmatprep.subr.mxu0 0.0
    %148 = vmatpush1.msra.mxu0 %v143
    %149 = vmatprep.subr.mxu0 0.0
    %150 = vmatpush1.msra.mxu0 0.0
    %151 = vmatprep.subr.mxu0 0.0
    %152 = vmatpush1.msra.mxu0 0.0
    %153 = vmatprep.subr.mxu0 0.0
    %154 = vmatpush1.msra.mxu0 0.0
    %155 = vmatprep.subr.mxu0 0.0
    %156 = vmatpush1.msra.mxu0 0.0
    %157 = vmatprep.subr.mxu0 0.0
    %158 = vmatpush1.msra.mxu0 0.0
    %159 = vmatprep.subr.mxu0 0.0
    %160 = vmatpush1.msra.mxu0 0.0
    %161 = vmatprep.subr.mxu0 0.0
    %162 = vmatpush1.msra.mxu0 0.0
    %163 = vmatprep.subr.mxu0 0.0
    %164 = vmatpush1.msra.mxu0 0.0
    %165 = vmatprep.subr.mxu0 0.0
    %166 = vmatpush1.msra.mxu0 0.0
    %167 = vmatprep.subr.mxu0 0.0
    %168 = vmatpush1.msra.mxu0 0.0
    %169 = vmatprep.subr.mxu0 0.0
    %170 = vmatpush1.msra.mxu0 0.0
    %171 = vmatprep.subr.mxu0 0.0
    %172 = vmatpush1.msra.mxu0 0.0
    %173 = vmatprep.subr.mxu0 0.0
    %174 = vmatpush1.msra.mxu0 0.0
    %175 = vmatprep.subr.mxu0 0.0
    %176 = vmatpush1.msra.mxu0 0.0
    %177 = vmatprep.subr.mxu0 0.0
    %178 = vmatpush1.msra.mxu0 0.0
    %179 = vmatprep.subr.mxu0 0.0
    %180 = vmatpush1.msra.mxu0 0.0
    %181 = vmatprep.subr.mxu0 0.0
    %182 = vmatpush1.msra.mxu0 0.0
    %183 = vmatprep.subr.mxu0 0.0
    %184 = vmatpush1.msra.mxu0 0.0
    %185 = vmatprep.subr.mxu0 0.0
    %186 = vmatpush1.msra.mxu0 0.0
    %187 = vmatprep.subr.mxu0 0.0
    %188 = vmatpush1.msra.mxu0 0.0
    %189 = vmatprep.subr.mxu0 0.0
    %190 = vmatpush1.msra.mxu0 0.0
    %191 = vmatprep.subr.mxu0 0.0
    %192 = vmatpush1.msra.mxu0 0.0
    %193 = vmatprep.subr.mxu0 0.0
    %194 = vmatpush1.msra.mxu0 0.0
    %195 = vmatprep.subr.mxu0 0.0
    %196 = vmatpush1.msra.mxu0 0.0
    %197 = vmatprep.subr.mxu0 0.0
    %198 = vmatpush1.msra.mxu0 0.0
    %199 = vmatprep.subr.mxu0 0.0
    %200 = vmatpush1.msra.mxu0 0.0
    %201 = vmatprep.subr.mxu0 0.0
    %202 = vmatpush1.msra.mxu0 0.0
    %203 = vmatprep.subr.mxu0 0.0
    %204 = vmatpush1.msra.mxu0 0.0
    %205 = vmatprep.subr.mxu0 0.0
    %206 = vmatpush1.msra.mxu0 0.0
    %207 = vmatprep.subr.mxu0 0.0
    %208 = vmatpush1.msra.mxu0 0.0
    %209 = vmatprep.mubr.f32.mxu0 0.0
    %210 = vmatmul.mubr.f32.gmra.mrb[0].mxu0 %v139
    %v211 = vpop.f32.mrb[0].mxu0
    %v212 = vadd.f32 0.0, %v211
    %v213 = vpop.f32.mrb[0].mxu0
    %214 = vdwg.mxu0
    %v217 = vcombine.high %v28, %v28
    %v219 = vunpack.c.l.s4 1983009808
    %v220 = vunpack.c.0.s8 %v219
    %v221 = vlaneseq
    %v222 = vshrl.u32 %v221, 7
    %v223 = vsub.s32 %v220, %v222
    %v224 = vrot.slane %v28, %v223
    %v226 = vunpack.c.l.s4 1983009808
    %v227 = vunpack.c.0.s8 %v226
    %v228 = vlaneseq
    %v229 = vshrl.u32 %v228, 7
    %v230 = vsub.s32 %v227, %v229
    %v231 = vrot.slane %v217, %v230
    %v232 = vcombine.high %v224, %v224
    %v233 = vcombine.high %v231, %v231
    %v234 = vcombine.high %v29, %v29
    %v236 = vunpack.c.l.s4 1983009808
    %v237 = vunpack.c.0.s8 %v236
    %v238 = vlaneseq
    %v239 = vshrl.u32 %v238, 7
    %v240 = vsub.s32 %v237, %v239
    %v241 = vrot.slane %v29, %v240
    %v243 = vunpack.c.l.s4 1983009808
    %v244 = vunpack.c.0.s8 %v243
    %v245 = vlaneseq
    %v246 = vshrl.u32 %v245, 7
    %v247 = vsub.s32 %v244, %v246
    %v248 = vrot.slane %v234, %v247
    %v249 = vcombine.high %v241, %v241
    %vm256 = vcmask 343040
    %v257 = vsel %vm256, %v248, 0
    %vm259 = vcmask 1041408
    %v261 = vsel %vm259, %v134, 0
    %263 = vmatprep.subr.mxu0 0.0
    %264 = vmatpush1.msra.mxu0 %v33
    %265 = vmatprep.subr.mxu0 0.0
    %266 = vmatpush1.msra.mxu0 %v34
    %267 = vmatprep.subr.mxu0 0.0
    %268 = vmatpush1.msra.mxu0 %v35
    %269 = vmatprep.subr.mxu0 0.0
    %270 = vmatpush1.msra.mxu0 %v36
    %271 = vmatprep.subr.mxu0 0.0
    %272 = vmatpush1.msra.mxu0 %v37
    %273 = vmatprep.subr.mxu0 0.0
    %274 = vmatpush1.msra.mxu0 %v38
    %275 = vmatprep.subr.mxu0 0.0
    %276 = vmatpush1.msra.mxu0 %v39
    %277 = vmatprep.subr.mxu0 0.0
    %278 = vmatpush1.msra.mxu0 %v40
    %279 = vmatprep.subr.mxu0 0.0
    %280 = vmatpush1.msra.mxu0 %v41
    %281 = vmatprep.subr.mxu0 0.0
    %282 = vmatpush1.msra.mxu0 %v42
    %283 = vmatprep.subr.mxu0 0.0
    %284 = vmatpush1.msra.mxu0 %v43
    %285 = vmatprep.subr.mxu0 0.0
    %286 = vmatpush1.msra.mxu0 %v44
    %287 = vmatprep.subr.mxu0 0.0
    %288 = vmatpush1.msra.mxu0 %v45
    %289 = vmatprep.subr.mxu0 0.0
    %290 = vmatpush1.msra.mxu0 %v46
    %291 = vmatprep.subr.mxu0 0.0
    %292 = vmatpush1.msra.mxu0 %v47
    %293 = vmatprep.subr.mxu0 0.0
    %294 = vmatpush1.msra.mxu0 %v48
    %295 = vmatprep.subr.mxu0 0.0
    %296 = vmatpush1.msra.mxu0 %v49
    %297 = vmatprep.subr.mxu0 0.0
    %298 = vmatpush1.msra.mxu0 %v50
    %299 = vmatprep.subr.mxu0 0.0
    %300 = vmatpush1.msra.mxu0 %v51
    %301 = vmatprep.subr.mxu0 0.0
    %302 = vmatpush1.msra.mxu0 %v52
    %303 = vmatprep.subr.mxu0 0.0
    %304 = vmatpush1.msra.mxu0 %v53
    %305 = vmatprep.subr.mxu0 0.0
    %306 = vmatpush1.msra.mxu0 %v54
    %307 = vmatprep.subr.mxu0 0.0
    %308 = vmatpush1.msra.mxu0 %v55
    %309 = vmatprep.subr.mxu0 0.0
    %310 = vmatpush1.msra.mxu0 %v56
    %311 = vmatprep.subr.mxu0 0.0
    %312 = vmatpush1.msra.mxu0 %v57
    %313 = vmatprep.subr.mxu0 0.0
    %314 = vmatpush1.msra.mxu0 %v58
    %315 = vmatprep.subr.mxu0 0.0
    %316 = vmatpush1.msra.mxu0 %v59
    %317 = vmatprep.subr.mxu0 0.0
    %318 = vmatpush1.msra.mxu0 %v60
    %319 = vmatprep.subr.mxu0 0.0
    %320 = vmatpush1.msra.mxu0 %v61
    %321 = vmatprep.subr.mxu0 0.0
    %322 = vmatpush1.msra.mxu0 %v62
    %323 = vmatprep.subr.mxu0 0.0
    %324 = vmatpush1.msra.mxu0 %v63
    %325 = vmatprep.subr.mxu0 0.0
    %326 = vmatpush1.msra.mxu0 %v64
    %327 = vmatprep.mubr.f32.mxu0 %v232
    %328 = vmatmul.mubr.f32.gmra.mrb[0].mxu0 %v224
    %v329 = vpop.f32.mrb[0].mxu0
    %v330 = vadd.f32 %v212, %v329
    %v331 = vpop.f32.mrb[0].mxu0
    %332 = vdwg.mxu0
    %333 = vmatprep.subr.mxu0 0.0
    %334 = vmatpush1.msra.mxu0 %v65
    %335 = vmatprep.subr.mxu0 0.0
    %336 = vmatpush1.msra.mxu0 %v66
    %337 = vmatprep.subr.mxu0 0.0
    %338 = vmatpush1.msra.mxu0 %v67
    %339 = vmatprep.subr.mxu0 0.0
    %340 = vmatpush1.msra.mxu0 %v68
    %341 = vmatprep.subr.mxu0 0.0
    %342 = vmatpush1.msra.mxu0 %v69
    %343 = vmatprep.subr.mxu0 0.0
    %344 = vmatpush1.msra.mxu0 %v70
    %345 = vmatprep.subr.mxu0 0.0
    %346 = vmatpush1.msra.mxu0 %v71
    %347 = vmatprep.subr.mxu0 0.0
    %348 = vmatpush1.msra.mxu0 %v72
    %349 = vmatprep.subr.mxu0 0.0
    %350 = vmatpush1.msra.mxu0 %v73
    %351 = vmatprep.subr.mxu0 0.0
    %352 = vmatpush1.msra.mxu0 %v74
    %353 = vmatprep.subr.mxu0 0.0
    %354 = vmatpush1.msra.mxu0 %v75
    %355 = vmatprep.subr.mxu0 0.0
    %356 = vmatpush1.msra.mxu0 %v76
    %357 = vmatprep.subr.mxu0 0.0
    %358 = vmatpush1.msra.mxu0 %v77
    %359 = vmatprep.subr.mxu0 0.0
    %360 = vmatpush1.msra.mxu0 %v78
    %361 = vmatprep.subr.mxu0 0.0
    %362 = vmatpush1.msra.mxu0 %v79
    %363 = vmatprep.subr.mxu0 0.0
    %364 = vmatpush1.msra.mxu0 %v80
    %365 = vmatprep.subr.mxu0 0.0
    %366 = vmatpush1.msra.mxu0 %v81
    %367 = vmatprep.subr.mxu0 0.0
    %368 = vmatpush1.msra.mxu0 %v82
    %369 = vmatprep.subr.mxu0 0.0
    %370 = vmatpush1.msra.mxu0 %v83
    %371 = vmatprep.subr.mxu0 0.0
    %372 = vmatpush1.msra.mxu0 %v84
    %373 = vmatprep.subr.mxu0 0.0
    %374 = vmatpush1.msra.mxu0 %v85
    %375 = vmatprep.subr.mxu0 0.0
    %376 = vmatpush1.msra.mxu0 %v86
    %377 = vmatprep.subr.mxu0 0.0
    %378 = vmatpush1.msra.mxu0 %v87
    %379 = vmatprep.subr.mxu0 0.0
    %380 = vmatpush1.msra.mxu0 %v88
    %381 = vmatprep.subr.mxu0 0.0
    %382 = vmatpush1.msra.mxu0 %v89
    %383 = vmatprep.subr.mxu0 0.0
    %384 = vmatpush1.msra.mxu0 %v90
    %385 = vmatprep.subr.mxu0 0.0
    %386 = vmatpush1.msra.mxu0 %v91
    %387 = vmatprep.subr.mxu0 0.0
    %388 = vmatpush1.msra.mxu0 %v92
    %389 = vmatprep.subr.mxu0 0.0
    %390 = vmatpush1.msra.mxu0 %v93
    %391 = vmatprep.subr.mxu0 0.0
    %392 = vmatpush1.msra.mxu0 %v94
    %393 = vmatprep.subr.mxu0 0.0
    %394 = vmatpush1.msra.mxu0 %v95
    %395 = vmatprep.subr.mxu0 0.0
    %396 = vmatpush1.msra.mxu0 %v96
    %397 = vmatprep.mubr.f32.mxu0 %v233
    %398 = vmatmul.mubr.f32.gmra.mrb[0].mxu0 %v231
    %v399 = vpop.f32.mrb[0].mxu0
    %v400 = vadd.f32 %v330, %v399
    %v401 = vpop.f32.mrb[0].mxu0
    %402 = vdwg.mxu0
    %403 = vmatprep.subr.mxu0 0.0
    %404 = vmatpush1.msra.mxu0 %v97
    %405 = vmatprep.subr.mxu0 0.0
    %406 = vmatpush1.msra.mxu0 %v98
    %407 = vmatprep.subr.mxu0 0.0
    %408 = vmatpush1.msra.mxu0 %v99
    %409 = vmatprep.subr.mxu0 0.0
    %410 = vmatpush1.msra.mxu0 %v100
    %411 = vmatprep.subr.mxu0 0.0
    %412 = vmatpush1.msra.mxu0 %v101
    %413 = vmatprep.subr.mxu0 0.0
    %414 = vmatpush1.msra.mxu0 %v102
    %415 = vmatprep.subr.mxu0 0.0
    %416 = vmatpush1.msra.mxu0 %v103
    %417 = vmatprep.subr.mxu0 0.0
    %418 = vmatpush1.msra.mxu0 %v104
    %419 = vmatprep.subr.mxu0 0.0
    %420 = vmatpush1.msra.mxu0 %v105
    %421 = vmatprep.subr.mxu0 0.0
    %422 = vmatpush1.msra.mxu0 %v106
    %423 = vmatprep.subr.mxu0 0.0
    %424 = vmatpush1.msra.mxu0 %v107
    %425 = vmatprep.subr.mxu0 0.0
    %426 = vmatpush1.msra.mxu0 %v108
    %427 = vmatprep.subr.mxu0 0.0
    %428 = vmatpush1.msra.mxu0 %v109
    %429 = vmatprep.subr.mxu0 0.0
    %430 = vmatpush1.msra.mxu0 %v110
    %431 = vmatprep.subr.mxu0 0.0
    %432 = vmatpush1.msra.mxu0 %v111
    %433 = vmatprep.subr.mxu0 0.0
    %434 = vmatpush1.msra.mxu0 %v112
    %435 = vmatprep.subr.mxu0 0.0
    %436 = vmatpush1.msra.mxu0 %v113
    %437 = vmatprep.subr.mxu0 0.0
    %438 = vmatpush1.msra.mxu0 %v114
    %439 = vmatprep.subr.mxu0 0.0
    %440 = vmatpush1.msra.mxu0 %v115
    %441 = vmatprep.subr.mxu0 0.0
    %442 = vmatpush1.msra.mxu0 %v116
    %443 = vmatprep.subr.mxu0 0.0
    %444 = vmatpush1.msra.mxu0 %v117
    %445 = vmatprep.subr.mxu0 0.0
    %446 = vmatpush1.msra.mxu0 %v118
    %447 = vmatprep.subr.mxu0 0.0
    %448 = vmatpush1.msra.mxu0 %v119
    %449 = vmatprep.subr.mxu0 0.0
    %450 = vmatpush1.msra.mxu0 %v120
    %451 = vmatprep.subr.mxu0 0.0
    %452 = vmatpush1.msra.mxu0 %v121
    %453 = vmatprep.subr.mxu0 0.0
    %454 = vmatpush1.msra.mxu0 %v122
    %455 = vmatprep.subr.mxu0 0.0
    %456 = vmatpush1.msra.mxu0 %v123
    %457 = vmatprep.subr.mxu0 0.0
    %458 = vmatpush1.msra.mxu0 %v124
    %459 = vmatprep.subr.mxu0 0.0
    %460 = vmatpush1.msra.mxu0 %v125
    %461 = vmatprep.subr.mxu0 0.0
    %462 = vmatpush1.msra.mxu0 %v126
    %463 = vmatprep.subr.mxu0 0.0
    %464 = vmatpush1.msra.mxu0 %v127
    %465 = vmatprep.subr.mxu0 0.0
    %466 = vmatpush1.msra.mxu0 %v128
    %467 = vmatprep.mubr.f32.mxu0 %v249
    %468 = vmatmul.mubr.f32.gmra.mrb[0].mxu0 %v241
    %v469 = vpop.f32.mrb[0].mxu0
    %v470 = vadd.f32 %v400, %v469
    %v471 = vpop.f32.mrb[0].mxu0
    %472 = vdwg.mxu0
    %473 = vmatprep.subr.mxu0 0.0
    %474 = vmatpush1.msra.mxu0 %v129
    %475 = vmatprep.subr.mxu0 0.0
    %476 = vmatpush1.msra.mxu0 %v130
    %477 = vmatprep.subr.mxu0 0.0
    %478 = vmatpush1.msra.mxu0 %v131
    %479 = vmatprep.subr.mxu0 0.0
    %480 = vmatpush1.msra.mxu0 %v132
    %481 = vmatprep.subr.mxu0 0.0
    %482 = vmatpush1.msra.mxu0 %v133
    %483 = vmatprep.subr.mxu0 0.0
    %484 = vmatpush1.msra.mxu0 %v261
    %485 = vmatprep.subr.mxu0 0.0
    %486 = vmatpush1.msra.mxu0 0.0
    %487 = vmatprep.subr.mxu0 0.0
    %488 = vmatpush1.msra.mxu0 0.0
    %489 = vmatprep.subr.mxu0 0.0
    %490 = vmatpush1.msra.mxu0 0.0
    %491 = vmatprep.subr.mxu0 0.0
    %492 = vmatpush1.msra.mxu0 0.0
    %493 = vmatprep.subr.mxu0 0.0
    %494 = vmatpush1.msra.mxu0 0.0
    %495 = vmatprep.subr.mxu0 0.0
    %496 = vmatpush1.msra.mxu0 0.0
    %497 = vmatprep.subr.mxu0 0.0
    %498 = vmatpush1.msra.mxu0 0.0
    %499 = vmatprep.subr.mxu0 0.0
    %500 = vmatpush1.msra.mxu0 0.0
    %501 = vmatprep.subr.mxu0 0.0
    %502 = vmatpush1.msra.mxu0 0.0
    %503 = vmatprep.subr.mxu0 0.0
    %504 = vmatpush1.msra.mxu0 0.0
    %505 = vmatprep.subr.mxu0 0.0
    %506 = vmatpush1.msra.mxu0 0.0
    %507 = vmatprep.subr.mxu0 0.0
    %508 = vmatpush1.msra.mxu0 0.0
    %509 = vmatprep.subr.mxu0 0.0
    %510 = vmatpush1.msra.mxu0 0.0
    %511 = vmatprep.subr.mxu0 0.0
    %512 = vmatpush1.msra.mxu0 0.0
    %513 = vmatprep.subr.mxu0 0.0
    %514 = vmatpush1.msra.mxu0 0.0
    %515 = vmatprep.subr.mxu0 0.0
    %516 = vmatpush1.msra.mxu0 0.0
    %517 = vmatprep.subr.mxu0 0.0
    %518 = vmatpush1.msra.mxu0 0.0
    %519 = vmatprep.subr.mxu0 0.0
    %520 = vmatpush1.msra.mxu0 0.0
    %521 = vmatprep.subr.mxu0 0.0
    %522 = vmatpush1.msra.mxu0 0.0
    %523 = vmatprep.subr.mxu0 0.0
    %524 = vmatpush1.msra.mxu0 0.0
    %525 = vmatprep.subr.mxu0 0.0
    %526 = vmatpush1.msra.mxu0 0.0
    %527 = vmatprep.subr.mxu0 0.0
    %528 = vmatpush1.msra.mxu0 0.0
    %529 = vmatprep.subr.mxu0 0.0
    %530 = vmatpush1.msra.mxu0 0.0
    %531 = vmatprep.subr.mxu0 0.0
    %532 = vmatpush1.msra.mxu0 0.0
    %533 = vmatprep.subr.mxu0 0.0
    %534 = vmatpush1.msra.mxu0 0.0
    %535 = vmatprep.subr.mxu0 0.0
    %536 = vmatpush1.msra.mxu0 0.0
    %537 = vmatprep.mubr.f32.mxu0 0.0
    %538 = vmatmul.mubr.f32.gmra.mrb[0].mxu0 %v257
    %v539 = vpop.f32.mrb[0].mxu0
    %v540 = vadd.f32 %v470, %v539
    %v541 = vpop.f32.mrb[0].mxu0
    %542 = vdwg.mxu0
    %s543 = sld [smem:[#allocation2]]
    %v544 = vstv %s543
    %v545 = vadd.f32 %v540, %v544
    %v546 = vld [vmem:[%s5] sm:$0xff]
    %v547 = vld [vmem:[%s5 + $0x8] sm:$0xff]
    %v548 = vld [vmem:[%s5 + $0x10] sm:$0xff]
    %v549 = vld [vmem:[%s5 + $0x18] sm:$0xff]
    %v550 = vld [vmem:[%s5 + $0x20] sm:$0xff]
    %v551 = vld [vmem:[%s5 + $0x28] sm:$0xff]
    %v552 = vld [vmem:[%s5 + $0x30] sm:$0xff]
    %v553 = vld [vmem:[%s5 + $0x38] sm:$0xff]
    %v554 = vld [vmem:[%s5 + $0x40] sm:$0xff]
    %v555 = vld [vmem:[%s5 + $0x48] sm:$0xff]
    %v556 = vld [vmem:[%s5 + $0x50] sm:$0xff]
    %v557 = vld [vmem:[%s5 + $0x58] sm:$0xff]
    %v558 = vld [vmem:[%s5 + $0x60] sm:$0xff]
    %v559 = vld [vmem:[%s5 + $0x68] sm:$0xff]
    %v560 = vld [vmem:[%s5 + $0x70] sm:$0xff]
    %v561 = vld [vmem:[%s5 + $0x78] sm:$0xff]
    %v562 = vld [vmem:[%s5 + $0x80] sm:$0xff]
    %v563 = vld [vmem:[%s5 + $0x88] sm:$0xff]
    %v564 = vld [vmem:[%s5 + $0x90] sm:$0xff]
    %v565 = vld [vmem:[%s5 + $0x98] sm:$0xff]
    %v566 = vld [vmem:[%s5 + $0xa0] sm:$0xff]
    %v567 = vld [vmem:[%s5 + $0xa8] sm:$0xff]
    %v568 = vld [vmem:[%s5 + $0xb0] sm:$0xff]
    %v569 = vld [vmem:[%s5 + $0xb8] sm:$0xff]
    %v570 = vld [vmem:[%s5 + $0xc0] sm:$0xff]
    %v571 = vld [vmem:[%s5 + $0xc8] sm:$0xff]
    %v572 = vld [vmem:[%s5 + $0xd0] sm:$0xff]
    %v573 = vld [vmem:[%s5 + $0xd8] sm:$0xff]
    %v574 = vld [vmem:[%s5 + $0xe0] sm:$0xff]
    %v575 = vld [vmem:[%s5 + $0xe8] sm:$0xff]
    %v576 = vld [vmem:[%s5 + $0xf0] sm:$0xff]
    %v577 = vld [vmem:[%s5 + $0xf8] sm:$0xff]
    %v578 = vld [vmem:[%s5 + $0x100] sm:$0xff]
    %v579 = vld [vmem:[%s5 + $0x108] sm:$0xff]
    %v580 = vld [vmem:[%s5 + $0x110] sm:$0xff]
    %v581 = vld [vmem:[%s5 + $0x118] sm:$0xff]
    %v582 = vld [vmem:[%s5 + $0x120] sm:$0xff]
    %v583 = vld [vmem:[%s5 + $0x128] sm:$0xff]
    %v584 = vld [vmem:[%s5 + $0x130] sm:$0xff]
    %v585 = vld [vmem:[%s5 + $0x138] sm:$0xff]
    %v586 = vld [vmem:[%s5 + $0x140] sm:$0xff]
    %v587 = vld [vmem:[%s5 + $0x148] sm:$0xff]
    %v588 = vld [vmem:[%s5 + $0x150] sm:$0xff]
    %v589 = vld [vmem:[%s5 + $0x158] sm:$0xff]
    %v590 = vld [vmem:[%s5 + $0x160] sm:$0xff]
    %v591 = vld [vmem:[%s5 + $0x168] sm:$0xff]
    %v592 = vld [vmem:[%s5 + $0x170] sm:$0xff]
    %v593 = vld [vmem:[%s5 + $0x178] sm:$0xff]
    %v594 = vld [vmem:[%s5 + $0x180] sm:$0xff]
    %v595 = vld [vmem:[%s5 + $0x188] sm:$0xff]
    %v596 = vld [vmem:[%s5 + $0x190] sm:$0xff]
    %v597 = vld [vmem:[%s5 + $0x198] sm:$0xff]
    %v598 = vld [vmem:[%s5 + $0x1a0] sm:$0xff]
    %v599 = vld [vmem:[%s5 + $0x1a8] sm:$0xff]
    %v600 = vld [vmem:[%s5 + $0x1b0] sm:$0xff]
    %v601 = vld [vmem:[%s5 + $0x1b8] sm:$0xff]
    %v602 = vld [vmem:[%s5 + $0x1c0] sm:$0xff]
    %v603 = vld [vmem:[%s5 + $0x1c8] sm:$0xff]
    %v604 = vld [vmem:[%s5 + $0x1d0] sm:$0xff]
    %v605 = vld [vmem:[%s5 + $0x1d8] sm:$0xff]
    %v606 = vld [vmem:[%s5 + $0x1e0] sm:$0xff]
    %v607 = vld [vmem:[%s5 + $0x1e8] sm:$0xff]
    %v608 = vld [vmem:[%s5 + $0x1f0] sm:$0xff]
    %v609 = vld [vmem:[%s5 + $0x1f8] sm:$0xff]
    %v610 = vld [vmem:[%s5 + $0x200] sm:$0xff]
    %v611 = vld [vmem:[%s5 + $0x208] sm:$0xff]
    %v612 = vld [vmem:[%s5 + $0x210] sm:$0xff]
    %v613 = vld [vmem:[%s5 + $0x218] sm:$0xff]
    %v614 = vld [vmem:[%s5 + $0x220] sm:$0xff]
    %v615 = vld [vmem:[%s5 + $0x228] sm:$0xff]
    %v616 = vld [vmem:[%s5 + $0x230] sm:$0xff]
    %v617 = vld [vmem:[%s5 + $0x238] sm:$0xff]
    %v618 = vld [vmem:[%s5 + $0x240] sm:$0xff]
    %v619 = vld [vmem:[%s5 + $0x248] sm:$0xff]
    %v620 = vld [vmem:[%s5 + $0x250] sm:$0xff]
    %v621 = vld [vmem:[%s5 + $0x258] sm:$0xff]
    %v622 = vld [vmem:[%s5 + $0x260] sm:$0xff]
    %v623 = vld [vmem:[%s5 + $0x268] sm:$0xff]
    %v624 = vld [vmem:[%s5 + $0x270] sm:$0xff]
    %v625 = vld [vmem:[%s5 + $0x278] sm:$0xff]
    %v626 = vld [vmem:[%s5 + $0x280] sm:$0xff]
    %v627 = vld [vmem:[%s5 + $0x288] sm:$0xff]
    %v628 = vld [vmem:[%s5 + $0x290] sm:$0xff]
    %v629 = vld [vmem:[%s5 + $0x298] sm:$0xff]
    %v630 = vld [vmem:[%s5 + $0x2a0] sm:$0xff]
    %v631 = vld [vmem:[%s5 + $0x2a8] sm:$0xff]
    %v632 = vld [vmem:[%s5 + $0x2b0] sm:$0xff]
    %v633 = vld [vmem:[%s5 + $0x2b8] sm:$0xff]
    %v634 = vld [vmem:[%s5 + $0x2c0] sm:$0xff]
    %v635 = vld [vmem:[%s5 + $0x2c8] sm:$0xff]
    %v636 = vld [vmem:[%s5 + $0x2d0] sm:$0xff]
    %v637 = vld [vmem:[%s5 + $0x2d8] sm:$0xff]
    %v638 = vld [vmem:[%s5 + $0x2e0] sm:$0xff]
    %v639 = vld [vmem:[%s5 + $0x2e8] sm:$0xff]
    %v640 = vld [vmem:[%s5 + $0x2f0] sm:$0xff]
    %v641 = vld [vmem:[%s5 + $0x2f8] sm:$0xff]
    %v644 = vcombine.high %v31, %v31
    %v646 = vunpack.c.l.s4 1983009808
    %v647 = vunpack.c.0.s8 %v646
    %v648 = vlaneseq
    %v649 = vshrl.u32 %v648, 7
    %v650 = vsub.s32 %v647, %v649
    %v651 = vrot.slane %v31, %v650
    %v653 = vunpack.c.l.s4 1983009808
    %v654 = vunpack.c.0.s8 %v653
    %v655 = vlaneseq
    %v656 = vshrl.u32 %v655, 7
    %v657 = vsub.s32 %v654, %v656
    %v658 = vrot.slane %v644, %v657
    %v659 = vcombine.high %v651, %v651
    %v660 = vcombine.high %v658, %v658
    %v662 = vunpack.c.l.s4 1983009808
    %v663 = vunpack.c.0.s8 %v662
    %v664 = vlaneseq
    %v665 = vshrl.u32 %v664, 7
    %v666 = vsub.s32 %v663, %v665
    %v667 = vrot.slane %v32, %v666
    %v668 = vcombine.high %v667, %v667
    %675 = vmatprep.subr.mxu0 0.0
    %676 = vmatpush1.msra.mxu0 %v546
    %677 = vmatprep.subr.mxu0 0.0
    %678 = vmatpush1.msra.mxu0 %v547
    %679 = vmatprep.subr.mxu0 0.0
    %680 = vmatpush1.msra.mxu0 %v548
    %681 = vmatprep.subr.mxu0 0.0
    %682 = vmatpush1.msra.mxu0 %v549
    %683 = vmatprep.subr.mxu0 0.0
    %684 = vmatpush1.msra.mxu0 %v550
    %685 = vmatprep.subr.mxu0 0.0
    %686 = vmatpush1.msra.mxu0 %v551
    %687 = vmatprep.subr.mxu0 0.0
    %688 = vmatpush1.msra.mxu0 %v552
    %689 = vmatprep.subr.mxu0 0.0
    %690 = vmatpush1.msra.mxu0 %v553
    %691 = vmatprep.subr.mxu0 0.0
    %692 = vmatpush1.msra.mxu0 %v554
    %693 = vmatprep.subr.mxu0 0.0
    %694 = vmatpush1.msra.mxu0 %v555
    %695 = vmatprep.subr.mxu0 0.0
    %696 = vmatpush1.msra.mxu0 %v556
    %697 = vmatprep.subr.mxu0 0.0
    %698 = vmatpush1.msra.mxu0 %v557
    %699 = vmatprep.subr.mxu0 0.0
    %700 = vmatpush1.msra.mxu0 %v558
    %701 = vmatprep.subr.mxu0 0.0
    %702 = vmatpush1.msra.mxu0 %v559
    %703 = vmatprep.subr.mxu0 0.0
    %704 = vmatpush1.msra.mxu0 %v560
    %705 = vmatprep.subr.mxu0 0.0
    %706 = vmatpush1.msra.mxu0 %v561
    %707 = vmatprep.subr.mxu0 0.0
    %708 = vmatpush1.msra.mxu0 %v562
    %709 = vmatprep.subr.mxu0 0.0
    %710 = vmatpush1.msra.mxu0 %v563
    %711 = vmatprep.subr.mxu0 0.0
    %712 = vmatpush1.msra.mxu0 %v564
    %713 = vmatprep.subr.mxu0 0.0
    %714 = vmatpush1.msra.mxu0 %v565
    %715 = vmatprep.subr.mxu0 0.0
    %716 = vmatpush1.msra.mxu0 %v566
    %717 = vmatprep.subr.mxu0 0.0
    %718 = vmatpush1.msra.mxu0 %v567
    %719 = vmatprep.subr.mxu0 0.0
    %720 = vmatpush1.msra.mxu0 %v568
    %721 = vmatprep.subr.mxu0 0.0
    %722 = vmatpush1.msra.mxu0 %v569
    %723 = vmatprep.subr.mxu0 0.0
    %724 = vmatpush1.msra.mxu0 %v570
    %725 = vmatprep.subr.mxu0 0.0
    %726 = vmatpush1.msra.mxu0 %v571
    %727 = vmatprep.subr.mxu0 0.0
    %728 = vmatpush1.msra.mxu0 %v572
    %729 = vmatprep.subr.mxu0 0.0
    %730 = vmatpush1.msra.mxu0 %v573
    %731 = vmatprep.subr.mxu0 0.0
    %732 = vmatpush1.msra.mxu0 %v574
    %733 = vmatprep.subr.mxu0 0.0
    %734 = vmatpush1.msra.mxu0 %v575
    %735 = vmatprep.subr.mxu0 0.0
    %736 = vmatpush1.msra.mxu0 %v576
    %737 = vmatprep.subr.mxu0 0.0
    %738 = vmatpush1.msra.mxu0 %v577
    %739 = vmatprep.mubr.f32.mxu0 %v659
    %740 = vmatmul.mubr.f32.gmra.mrb[0].mxu0 %v651
    %v741 = vpop.f32.mrb[0].mxu0
    %v742 = vadd.f32 0.0, %v741
    %v743 = vpop.f32.mrb[0].mxu0
    %744 = vdwg.mxu0
    %745 = vmatprep.subr.mxu0 0.0
    %746 = vmatpush1.msra.mxu0 %v578
    %747 = vmatprep.subr.mxu0 0.0
    %748 = vmatpush1.msra.mxu0 %v579
    %749 = vmatprep.subr.mxu0 0.0
    %750 = vmatpush1.msra.mxu0 %v580
    %751 = vmatprep.subr.mxu0 0.0
    %752 = vmatpush1.msra.mxu0 %v581
    %753 = vmatprep.subr.mxu0 0.0
    %754 = vmatpush1.msra.mxu0 %v582
    %755 = vmatprep.subr.mxu0 0.0
    %756 = vmatpush1.msra.mxu0 %v583
    %757 = vmatprep.subr.mxu0 0.0
    %758 = vmatpush1.msra.mxu0 %v584
    %759 = vmatprep.subr.mxu0 0.0
    %760 = vmatpush1.msra.mxu0 %v585
    %761 = vmatprep.subr.mxu0 0.0
    %762 = vmatpush1.msra.mxu0 %v586
    %763 = vmatprep.subr.mxu0 0.0
    %764 = vmatpush1.msra.mxu0 %v587
    %765 = vmatprep.subr.mxu0 0.0
    %766 = vmatpush1.msra.mxu0 %v588
    %767 = vmatprep.subr.mxu0 0.0
    %768 = vmatpush1.msra.mxu0 %v589
    %769 = vmatprep.subr.mxu0 0.0
    %770 = vmatpush1.msra.mxu0 %v590
    %771 = vmatprep.subr.mxu0 0.0
    %772 = vmatpush1.msra.mxu0 %v591
    %773 = vmatprep.subr.mxu0 0.0
    %774 = vmatpush1.msra.mxu0 %v592
    %775 = vmatprep.subr.mxu0 0.0
    %776 = vmatpush1.msra.mxu0 %v593
    %777 = vmatprep.subr.mxu0 0.0
    %778 = vmatpush1.msra.mxu0 %v594
    %779 = vmatprep.subr.mxu0 0.0
    %780 = vmatpush1.msra.mxu0 %v595
    %781 = vmatprep.subr.mxu0 0.0
    %782 = vmatpush1.msra.mxu0 %v596
    %783 = vmatprep.subr.mxu0 0.0
    %784 = vmatpush1.msra.mxu0 %v597
    %785 = vmatprep.subr.mxu0 0.0
    %786 = vmatpush1.msra.mxu0 %v598
    %787 = vmatprep.subr.mxu0 0.0
    %788 = vmatpush1.msra.mxu0 %v599
    %789 = vmatprep.subr.mxu0 0.0
    %790 = vmatpush1.msra.mxu0 %v600
    %791 = vmatprep.subr.mxu0 0.0
    %792 = vmatpush1.msra.mxu0 %v601
    %793 = vmatprep.subr.mxu0 0.0
    %794 = vmatpush1.msra.mxu0 %v602
    %795 = vmatprep.subr.mxu0 0.0
    %796 = vmatpush1.msra.mxu0 %v603
    %797 = vmatprep.subr.mxu0 0.0
    %798 = vmatpush1.msra.mxu0 %v604
    %799 = vmatprep.subr.mxu0 0.0
    %800 = vmatpush1.msra.mxu0 %v605
    %801 = vmatprep.subr.mxu0 0.0
    %802 = vmatpush1.msra.mxu0 %v606
    %803 = vmatprep.subr.mxu0 0.0
    %804 = vmatpush1.msra.mxu0 %v607
    %805 = vmatprep.subr.mxu0 0.0
    %806 = vmatpush1.msra.mxu0 %v608
    %807 = vmatprep.subr.mxu0 0.0
    %808 = vmatpush1.msra.mxu0 %v609
    %809 = vmatprep.mubr.f32.mxu0 %v660
    %810 = vmatmul.mubr.f32.gmra.mrb[0].mxu0 %v658
    %v811 = vpop.f32.mrb[0].mxu0
    %v812 = vadd.f32 %v742, %v811
    %v813 = vpop.f32.mrb[0].mxu0
    %814 = vdwg.mxu0
    %815 = vmatprep.subr.mxu0 0.0
    %816 = vmatpush1.msra.mxu0 %v610
    %817 = vmatprep.subr.mxu0 0.0
    %818 = vmatpush1.msra.mxu0 %v611
    %819 = vmatprep.subr.mxu0 0.0
    %820 = vmatpush1.msra.mxu0 %v612
    %821 = vmatprep.subr.mxu0 0.0
    %822 = vmatpush1.msra.mxu0 %v613
    %823 = vmatprep.subr.mxu0 0.0
    %824 = vmatpush1.msra.mxu0 %v614
    %825 = vmatprep.subr.mxu0 0.0
    %826 = vmatpush1.msra.mxu0 %v615
    %827 = vmatprep.subr.mxu0 0.0
    %828 = vmatpush1.msra.mxu0 %v616
    %829 = vmatprep.subr.mxu0 0.0
    %830 = vmatpush1.msra.mxu0 %v617
    %831 = vmatprep.subr.mxu0 0.0
    %832 = vmatpush1.msra.mxu0 %v618
    %833 = vmatprep.subr.mxu0 0.0
    %834 = vmatpush1.msra.mxu0 %v619
    %835 = vmatprep.subr.mxu0 0.0
    %836 = vmatpush1.msra.mxu0 %v620
    %837 = vmatprep.subr.mxu0 0.0
    %838 = vmatpush1.msra.mxu0 %v621
    %839 = vmatprep.subr.mxu0 0.0
    %840 = vmatpush1.msra.mxu0 %v622
    %841 = vmatprep.subr.mxu0 0.0
    %842 = vmatpush1.msra.mxu0 %v623
    %843 = vmatprep.subr.mxu0 0.0
    %844 = vmatpush1.msra.mxu0 %v624
    %845 = vmatprep.subr.mxu0 0.0
    %846 = vmatpush1.msra.mxu0 %v625
    %847 = vmatprep.subr.mxu0 0.0
    %848 = vmatpush1.msra.mxu0 %v626
    %849 = vmatprep.subr.mxu0 0.0
    %850 = vmatpush1.msra.mxu0 %v627
    %851 = vmatprep.subr.mxu0 0.0
    %852 = vmatpush1.msra.mxu0 %v628
    %853 = vmatprep.subr.mxu0 0.0
    %854 = vmatpush1.msra.mxu0 %v629
    %855 = vmatprep.subr.mxu0 0.0
    %856 = vmatpush1.msra.mxu0 %v630
    %857 = vmatprep.subr.mxu0 0.0
    %858 = vmatpush1.msra.mxu0 %v631
    %859 = vmatprep.subr.mxu0 0.0
    %860 = vmatpush1.msra.mxu0 %v632
    %861 = vmatprep.subr.mxu0 0.0
    %862 = vmatpush1.msra.mxu0 %v633
    %863 = vmatprep.subr.mxu0 0.0
    %864 = vmatpush1.msra.mxu0 %v634
    %865 = vmatprep.subr.mxu0 0.0
    %866 = vmatpush1.msra.mxu0 %v635
    %867 = vmatprep.subr.mxu0 0.0
    %868 = vmatpush1.msra.mxu0 %v636
    %869 = vmatprep.subr.mxu0 0.0
    %870 = vmatpush1.msra.mxu0 %v637
    %871 = vmatprep.subr.mxu0 0.0
    %872 = vmatpush1.msra.mxu0 %v638
    %873 = vmatprep.subr.mxu0 0.0
    %874 = vmatpush1.msra.mxu0 %v639
    %875 = vmatprep.subr.mxu0 0.0
    %876 = vmatpush1.msra.mxu0 %v640
    %877 = vmatprep.subr.mxu0 0.0
    %878 = vmatpush1.msra.mxu0 %v641
    %879 = vmatprep.mubr.f32.mxu0 %v668
    %880 = vmatmul.mubr.f32.gmra.mrb[0].mxu0 %v667
    %v881 = vpop.f32.mrb[0].mxu0
    %v882 = vadd.f32 %v812, %v881
    %v883 = vpop.f32.mrb[0].mxu0
    %884 = vdwg.mxu0
    %886 = vset.pattern.permute.xlu0 0
    %887 = vperm.xlu0 %886, %v545
    %v888 = vpop.permute.xlu0 %887
    %v890 = vadd.f32 %v888, %v882
    %vm891 = vcmask 58368
    %892 = vst.msk [vmem:[#allocation3] sm:$0x3] %vm891, %v890
    // Predicated region
    $region30: #{tpu_custom_call.1} parent=1 // pred_check
      _
    $region31: #{tpu_custom_call.1} parent=1 // pred_check_branch
      %894 = sbr.rel (0) target = $region33
    $region32: #{tpu_custom_call.1} parent=1 // pred_region
      %s896 = ssub.s32 32, 32
      %897 = vsyncadd [#allocation4], %s896
      %s899 = sshll.u32 [#allocation3], 4
      %s900 = int_to_ptr.vmem [resolvable:$true] %s899
      %902 = dma.vmem_to_hbm [thread:$0]  %s900, 32, %s7, [#allocation4]
    $region33: #{tpu_custom_call.1} parent=1 // pred_fallthru
      _
    // Predicated region
    $region34: #{tpu_custom_call.1} parent=1 // pred_check
      _
    $region35: #{tpu_custom_call.1} parent=1 // pred_check_branch
      %904 = sbr.rel (0) target = $region37
    $region36: #{tpu_custom_call.1} parent=1 // pred_region
      %905 = dma.done [#allocation4], 32
    $region37: #{tpu_custom_call.1} parent=1 // pred_fallthru
      _
    %906 = vsyncpa [#allocation4], 1

</llo_original>
